<compile_context>
chip_gen: v6e
topology: v6e:2x2x1
jax: 0.10.0
libtpu: 0.0.40
codegen_flags: <defaults>
</compile_context>

<pallas_src>
import jax
import jax.numpy as jnp
import numpy as np
from jax.experimental import pallas as pl
from jax.experimental.pallas import tpu as pltpu


def _noop_kernel(x_hbm_ref, o_hbm_ref):
    # forward() is `pass`: nothing to compute.  o_hbm_ref aliases x_hbm_ref's
    # HBM buffer, so no data movement is required; touch() only pins a fake
    # read+write dependency so the aliased output materializes.
    del x_hbm_ref
    pltpu.touch(o_hbm_ref)


def _zero_copy_forward(x: jax.Array) -> jax.Array:
    return pl.pallas_call(
        _noop_kernel,
        out_shape=jax.ShapeDtypeStruct(x.shape, x.dtype),
        in_specs=[pl.BlockSpec(memory_space=pl.ANY)],   # stay in HBM, no auto-DMA
        out_specs=pl.BlockSpec(memory_space=pl.ANY),
        input_output_aliases={0: 0},                    # output IS the input buffer
        grid=(),
    )(x)


def _copy_kernel(x_ref, o_ref):
    # Whole tile is a single VMEM-resident block; trivial pass-through copy.
    o_ref[...] = x_ref[...]


def _lane_dense_copy_forward(x: jax.Array) -> jax.Array:
    # Fallback path: present a lane-dense layout (last dim = 128) so the copy
    # uses full vregs / unmasked stores; still aliased so no new HBM buffer.
    lanes = 128
    assert x.size % lanes == 0
    flat = x.reshape(x.size // lanes, lanes)            # (16, 128) for (2,4,16,16)
    out = pl.pallas_call(
        _copy_kernel,
        out_shape=jax.ShapeDtypeStruct(flat.shape, flat.dtype),
        in_specs=[pl.BlockSpec(flat.shape, lambda: (0, 0))],
        out_specs=pl.BlockSpec(flat.shape, lambda: (0, 0)),
        input_output_aliases={0: 0},
        grid=(),
    )(flat)
    return out.reshape(x.shape)


def basic_module_forward(x: jax.Array) -> jax.Array:
    """Pallas realization of BasicModule.forward() (a no-op pass-through)."""
    try:
        return _zero_copy_forward(x)
    except Exception:  # older Mosaic without ANY-space touch lowering
        return _lane_dense_copy_forward(x)


if __name__ == "__main__":
    key = jax.random.PRNGKey(0)
    # Small NCHW input consistent with a typical vision module built on BasicModule.
    x = jax.random.normal(key, (2, 4, 16, 16), dtype=jnp.float32)
    x_host = np.asarray(x)              # host reference copy (robust to output aliasing)

    y = basic_module_forward(x)
    jax.block_until_ready(y)

    # Sanity check: forward has no computation, so output must equal input.
    assert y.shape == x_host.shape and y.dtype == x_host.dtype
    assert np.array_equal(np.asarray(y), x_host)
    print("KERNEL_OK")
</pallas_src>

<mosaic_0001>
module attributes {stable_mosaic.version = 11 : i64} {
  func.func @_noop_kernel(%arg0: memref<2x4x16x16xf32, #tpu.memory_space<any>>, %arg1: memref<2x4x16x16xf32, #tpu.memory_space<any>>) attributes {dimension_semantics = [], scalar_prefetch = 0 : i64, scratch_operands = 0 : i64, tpu.core_type = #tpu.core_type<tc>} {
    return
  }
}

module attributes {stable_mosaic.version = 11 : i64} {
  func.func @_copy_kernel(%arg0: memref<16x128xf32, #tpu.memory_space<vmem>>, %arg1: memref<16x128xf32, #tpu.memory_space<vmem>>) attributes {dimension_semantics = [], scalar_prefetch = 0 : i64, scratch_operands = 0 : i64, tpu.core_type = #tpu.core_type<tc>} {
    %c0 = arith.constant 0 : index
    %c0_0 = arith.constant 0 : index
    %0 = vector.load %arg0[%c0, %c0_0] : memref<16x128xf32, #tpu.memory_space<vmem>>, vector<16x128xf32>
    %c0_1 = arith.constant 0 : index
    %c0_2 = arith.constant 0 : index
    %1 = vector.load %arg1[%c0_1, %c0_2] : memref<16x128xf32, #tpu.memory_space<vmem>>, vector<16x128xf32>
    tpu.vector_store %arg1[%c0_1, %c0_2], %0 {strides = array<i32>} : memref<16x128xf32, #tpu.memory_space<vmem>>, vector<16x128xf32>,
    return
  }
}

</mosaic_0001>

<llo_original>
// kernel: tpu_custom_call.1
$region0: #{tpu_custom_call.1}
  #allocation0 [shape = 'u32[]', space=smem, size = 0x4, offset = 0x4, fixed_abs, tag = 'smem constant byte address 0x4 - core index']
  #allocation1 [shape = 'u32[144,128]{1,0:T(1,128)}', space=vmem, size = 0x12000, scoped, tag = 'internal scratch']
  %s0 = inlined_call_operand.hbm [shape: f32[2,4,16,16], index: 0, kind: input, shape index: {}, may-alias: {0,1}]
  %s1 = inlined_call_operand.hbm [shape: f32[2,4,16,16], index: 1, kind: output, shape index: {}, may-alias: {0,1}]
  %s2 = sld [smem:[#allocation0]]
  $region2: #{tpu_custom_call.1} parent=0
    _
  %s4 = ssub.s32 1, %s2
  %s5 = scalar_select 0, %s4, %s2

// kernel: tpu_custom_call.1
$region0: #{tpu_custom_call.1}
  #allocation0 [shape = 'u32[]', space=smem, size = 0x4, offset = 0x4, fixed_abs, tag = 'smem constant byte address 0x4 - core index']
  #allocation1 [shape = 'u32[144,128]{1,0:T(1,128)}', space=vmem, size = 0x12000, scoped, tag = 'internal scratch']
  %s0 = inlined_call_operand.hbm [shape: f32[16,128], index: 0, kind: input, shape index: {}, may-alias: {0,1}]
  %s1 = inlined_call_operand.hbm [shape: f32[16,128], index: 1, kind: output, shape index: {}, may-alias: {0,1}]
  %s2 = sld [smem:[#allocation0]]
  $region18: #{tpu_custom_call.1} parent=0
    _
  %s4 = ssub.s32 1, %s2
  %s5 = scalar_select 0, %s4, %s2
  $region1: #{tpu_custom_call.1} parent=0
    #allocation2 [shape = 'u8[8192]{0}', space=vmem, size = 0x2000, scoped, tag = 'input window, operand 0, single buffered']
    #allocation3 [shape = 's32[1]{0}', space=sflag, size = 0x4, scoped, tag = 'scoped memory for tpu_custom_call.1']
    #allocation4 [shape = 's32[1]{0}', space=sflag, size = 0x4, scoped, tag = 'scoped memory for tpu_custom_call.1']
    #allocation5 [shape = 'u8[8192]{0}', space=vmem, size = 0x2000, scoped, tag = 'output window, operand 0, single buffered']
    %6 = vsyncpa [#allocation3], 0
    %7 = vsyncpa [#allocation4], 0
    // Predicated region
    $region2: #{tpu_custom_call.1} parent=1 // pred_check
      _
    $region3: #{tpu_custom_call.1} parent=1 // pred_check_branch
      %9 = sbr.rel (0) target = $region5
    $region4: #{tpu_custom_call.1} parent=1 // pred_region
      %s11 = ssub.s32 256, 256
      %12 = vsyncadd [#allocation3], %s11
      %s13 = sshll.u32 [#allocation2], 4
      %s14 = int_to_ptr.vmem [resolvable:$true] %s13
      %19 = dma.hbm_to_vmem [thread:$0]  %s0, 256, %s14, [#allocation3], 128, 128, 8
    $region5: #{tpu_custom_call.1} parent=1 // pred_fallthru
      _
    // Predicated region
    $region6: #{tpu_custom_call.1} parent=1 // pred_check
      _
    $region7: #{tpu_custom_call.1} parent=1 // pred_check_branch
      %21 = sbr.rel (0) target = $region9
    $region8: #{tpu_custom_call.1} parent=1 // pred_region
      %22 = dma.done [#allocation3], 256
    $region9: #{tpu_custom_call.1} parent=1 // pred_fallthru
      _
    %v23 = vld [vmem:[#allocation2] sm:$0xff]
    %v24 = vld [vmem:[#allocation2 + $0x8] sm:$0xff]
    %25 = vst [vmem:[#allocation5] sm:$0xff] %v23
    %26 = vst [vmem:[#allocation5 + $0x8] sm:$0xff] %v24
    // Predicated region
    $region10: #{tpu_custom_call.1} parent=1 // pred_check
      _
    $region11: #{tpu_custom_call.1} parent=1 // pred_check_branch
      %28 = sbr.rel (0) target = $region13
    $region12: #{tpu_custom_call.1} parent=1 // pred_region
      %s30 = ssub.s32 256, 256
      %31 = vsyncadd [#allocation4], %s30
      %s32 = sshll.u32 [#allocation5], 4
      %s33 = int_to_ptr.vmem [resolvable:$true] %s32
      %38 = dma.vmem_to_hbm [thread:$0]  %s33, 256, %s1, [#allocation4], 128, 128, 8
    $region13: #{tpu_custom_call.1} parent=1 // pred_fallthru
      _
    // Predicated region
    $region14: #{tpu_custom_call.1} parent=1 // pred_check
      _
    $region15: #{tpu_custom_call.1} parent=1 // pred_check_branch
      %40 = sbr.rel (0) target = $region17
    $region16: #{tpu_custom_call.1} parent=1 // pred_region
      %41 = dma.done [#allocation4], 256
    $region17: #{tpu_custom_call.1} parent=1 // pred_fallthru
      _
    %42 = vsyncpa [#allocation3], 1
    %43 = vsyncpa [#allocation4], 1

</llo_original>
